<compile_context>
chip_gen: v7x
topology: tpu7x:2x2x1
jax: 0.10.0
libtpu: 0.0.40
codegen_flags: <defaults>
</compile_context>

<pallas_src>
import functools

import jax
import jax.numpy as jnp
from jax.experimental import pallas as pl
from jax.experimental.pallas import tpu as pltpu


# ------------------------- fused forward kernel ------------------------------
def fused_forward_kernel(xs_ref, al1_ref, al2_ref, deg_ref,
                         w1_ref, b1_ref, w2_ref, b2_ref,
                         g1w_ref, g1b_ref, g2w_ref, g2b_ref,
                         w3a_ref, w3b_ref, sc_ref,
                         hcat_ref, beta_ref, *, n):
    f32 = jnp.float32

    # ---- GCN layer 1 (all 4 branches) ---------------------------------------
    # Shared feature transform computed once for x1 and once for x2.
    xw = jnp.dot(xs_ref[...], w1_ref[...], preferred_element_type=f32)   # [2N,2H]
    # Block-structured adjacency selects the right xw rows per branch AND
    # applies that branch's adjacency in a single MXU op.
    z1 = jnp.dot(al1_ref[...], xw, preferred_element_type=f32) + b1_ref[...]
    # Model applies F.relu right after GCN1's PReLU; for slope alpha >= 0 this
    # equals plain ReLU, so the PReLU select is skipped (alpha1 = 0.25 > 0).
    h = jnp.maximum(z1, 0.0)                                             # [4N,2H]

    # ---- GCN layer 2 (all 4 branches) ---------------------------------------
    hw = jnp.dot(h, w2_ref[...], preferred_element_type=f32)            # [4N,H]
    z2 = jnp.dot(al2_ref[...], hw, preferred_element_type=f32) + b2_ref[...]
    alpha2 = sc_ref[0]
    out2 = jnp.where(z2 > 0.0, z2, alpha2 * z2)                         # PReLU

    hb1 = out2[0 * n:1 * n, :]   # h1
    hb2 = out2[1 * n:2 * n, :]   # h2
    hb3 = out2[2 * n:3 * n, :]   # h3
    hb4 = out2[3 * n:4 * n, :]   # h4
    # Lane-dense output slab [N, 4H] (= 128 lanes) instead of 4x 32-lane stores.
    hcat_ref[...] = jnp.concatenate([hb1, hb2, hb3, hb4], axis=1)

    # ---- MLP gate: beta = sigmoid([gate1(h1) | gate2(h3) | deg] @ w3 + b3) ---
    zg1 = jnp.dot(hb1, g1w_ref[...], preferred_element_type=f32) + g1b_ref[...]
    zg2 = jnp.dot(hb3, g2w_ref[...], preferred_element_type=f32) + g2b_ref[...]
    logits = (jnp.dot(zg1, w3a_ref[...], preferred_element_type=f32)
              + jnp.dot(zg2, w3b_ref[...], preferred_element_type=f32)
              + deg_ref[...] * sc_ref[1]     # deg column of gate3 weight
              + sc_ref[2])                   # gate3 bias
    beta_ref[...] = jax.nn.sigmoid(logits)


# --------------------------------- wrapper -----------------------------------
@jax.jit
def model_forward(params, x1, x2, adj1, adj2, drop_edge_adj, deg):
    n, f_in = x1.shape
    h2 = params["gcn1_w"].shape[1]        # 2 * hidden
    hid = params["gcn2_w"].shape[1]       # hidden
    g = params["g1_w"].shape[1]           # gate

    # One stacked matmul for the layer-1 feature transform (dedups x1 @ W1
    # across the h1 / h3 / h4 branches).
    xstack = jnp.concatenate([x1, x2], axis=0).astype(jnp.float32)      # [2N,F]

    z = jnp.zeros((n, n), jnp.float32)
    # Layer-1 "select + propagate" adjacency: row-block b = branch b; the
    # column block picks x1- or x2-derived features.
    adj_l1 = jnp.concatenate([
        jnp.concatenate([adj1, z], axis=1),            # h1: adj1  @ (x1 W1)
        jnp.concatenate([z, adj1], axis=1),            # h2: adj1  @ (x2 W1)
        jnp.concatenate([adj2, z], axis=1),            # h3: adj2  @ (x1 W1)
        jnp.concatenate([drop_edge_adj, z], axis=1),   # h4: dropA @ (x1 W1)
    ], axis=0)                                         # [4N, 2N]
    # Layer-2 block-diagonal adjacency (same branch -> adjacency mapping).
    adj_l2 = jnp.concatenate([
        jnp.concatenate([adj1, z, z, z], axis=1),
        jnp.concatenate([z, adj1, z, z], axis=1),
        jnp.concatenate([z, z, adj2, z], axis=1),
        jnp.concatenate([z, z, z, drop_edge_adj], axis=1),
    ], axis=0)                                         # [4N, 4N]

    w3 = params["g3_w"]                   # [2g+1, 1]
    w3a = w3[:g, :]                       # multiplies gate1(h1)
    w3b = w3[g:2 * g, :]                  # multiplies gate2(h3)
    scalars = jnp.stack([params["gcn2_a"],
                         w3[2 * g, 0],
                         params["g3_b"][0]]).astype(jnp.float32)        # [3]

    hcat, beta = pl.pallas_call(
        functools.partial(fused_forward_kernel, n=n),
        out_shape=(jax.ShapeDtypeStruct((n, 4 * hid), jnp.float32),
                   jax.ShapeDtypeStruct((n, 1), jnp.float32)),
        grid=(1,),
        in_specs=[
            pl.BlockSpec((2 * n, f_in), lambda i: (0, 0)),      # xstack
            pl.BlockSpec((4 * n, 2 * n), lambda i: (0, 0)),     # adj_l1
            pl.BlockSpec((4 * n, 4 * n), lambda i: (0, 0)),     # adj_l2
            pl.BlockSpec((n, 1), lambda i: (0, 0)),             # deg
            pl.BlockSpec((f_in, h2), lambda i: (0, 0)),         # W1
            pl.BlockSpec((1, h2), lambda i: (0, 0)),            # b1
            pl.BlockSpec((h2, hid), lambda i: (0, 0)),          # W2
            pl.BlockSpec((1, hid), lambda i: (0, 0)),           # b2
            pl.BlockSpec((hid, g), lambda i: (0, 0)),           # gate1 W
            pl.BlockSpec((1, g), lambda i: (0, 0)),             # gate1 b
            pl.BlockSpec((hid, g), lambda i: (0, 0)),           # gate2 W
            pl.BlockSpec((1, g), lambda i: (0, 0)),             # gate2 b
            pl.BlockSpec((g, 1), lambda i: (0, 0)),             # w3a
            pl.BlockSpec((g, 1), lambda i: (0, 0)),             # w3b
            pl.BlockSpec(memory_space=pltpu.SMEM),              # scalars
        ],
        out_specs=(pl.BlockSpec((n, 4 * hid), lambda i: (0, 0)),
                   pl.BlockSpec((n, 1), lambda i: (0, 0))),
    )(xstack, adj_l1, adj_l2, deg,
      params["gcn1_w"], params["gcn1_b"].reshape(1, h2),
      params["gcn2_w"], params["gcn2_b"].reshape(1, hid),
      params["g1_w"], params["g1_b"].reshape(1, g),
      params["g2_w"], params["g2_b"].reshape(1, g),
      w3a, w3b, scalars)

    h1 = hcat[:, 0 * hid:1 * hid]
    h2_out = hcat[:, 1 * hid:2 * hid]
    h3 = hcat[:, 2 * hid:3 * hid]
    h4 = hcat[:, 3 * hid:4 * hid]
    return h1, h2_out, h3, h4, beta


# ------------------------------ params & reference ---------------------------
def init_params(key, f_in, hidden, gate):
    ks = jax.random.split(key, 8)

    def xavier_uniform(k, fan_in, fan_out, shape):
        bound = jnp.sqrt(6.0 / (fan_in + fan_out))
        return jax.random.uniform(k, shape, jnp.float32, -bound, bound)

    def xavier_normal(k, fan_in, fan_out, shape, gain=1.414):
        std = gain * jnp.sqrt(2.0 / (fan_in + fan_out))
        return jax.random.normal(k, shape, jnp.float32) * std

    h2 = 2 * hidden
    return {
        # GCN(input, 2*hidden): fc weight xavier_uniform, bias 0, PReLU a=0.25
        "gcn1_w": xavier_uniform(ks[0], f_in, h2, (f_in, h2)),
        "gcn1_b": jnp.zeros((h2,), jnp.float32),
        "gcn1_a": jnp.float32(0.25),   # folded into ReLU inside the kernel
        # GCN(2*hidden, hidden)
        "gcn2_w": xavier_uniform(ks[1], h2, hidden, (h2, hidden)),
        "gcn2_b": jnp.zeros((hidden,), jnp.float32),
        "gcn2_a": jnp.float32(0.25),
        # MLP gates (weights stored as [in, out])
        "g1_w": xavier_normal(ks[2], hidden, gate, (hidden, gate)),
        "g1_b": jax.random.uniform(ks[3], (gate,), jnp.float32, -0.1, 0.1),
        "g2_w": xavier_normal(ks[4], hidden, gate, (hidden, gate)),
        "g2_b": jax.random.uniform(ks[5], (gate,), jnp.float32, -0.1, 0.1),
        "g3_w": xavier_normal(ks[6], 2 * gate + 1, 1, (2 * gate + 1, 1)),
        "g3_b": jax.random.uniform(ks[7], (1,), jnp.float32, -0.1, 0.1),
    }


def _ref_forward(params, x1, x2, adj1, adj2, adjd, deg):
    """Pure-JAX reference (includes the full ReLU(PReLU(.)) composition)."""
    def gcn(x, adj, w, b, a):
        z = adj @ (x @ w) + b
        return jnp.where(z > 0.0, z, a * z)

    def branch(x, adj):
        h = jnp.maximum(
            gcn(x, adj, params["gcn1_w"], params["gcn1_b"], params["gcn1_a"]),
            0.0)
        return gcn(h, adj, params["gcn2_w"], params["gcn2_b"], params["gcn2_a"])

    h1 = branch(x1, adj1)
    h2 = branch(x2, adj1)
    h3 = branch(x1, adj2)
    h4 = branch(x1, adjd)
    z1 = h1 @ params["g1_w"] + params["g1_b"]
    z2 = h3 @ params["g2_w"] + params["g2_b"]
    cat = jnp.concatenate([z1, z2, deg], axis=1)
    beta = jax.nn.sigmoid(cat @ params["g3_w"] + params["g3_b"])
    return h1, h2, h3, h4, beta


# ----------------------------------- main -------------------------------------
if __name__ == "__main__":
    N, F_IN, HIDDEN, GATE = 16, 32, 32, 16

    key = jax.random.PRNGKey(0)
    kp, kx1, kx2, ka1, ka2, kad, kdeg = jax.random.split(key, 7)

    params = init_params(kp, F_IN, HIDDEN, GATE)

    x1 = jax.random.normal(kx1, (N, F_IN), jnp.float32)
    x2 = jax.random.normal(kx2, (N, F_IN), jnp.float32)

    def make_adj(k):
        a = (jax.random.uniform(k, (N, N)) > 0.7).astype(jnp.float32)
        a = jnp.maximum(a, a.T) + jnp.eye(N, dtype=jnp.float32)
        d = jnp.sum(a, axis=1, keepdims=True)
        return a / jnp.sqrt(d) / jnp.sqrt(d.T)  # symmetric normalization

    adj1 = make_adj(ka1)
    adj2 = make_adj(ka2)
    drop_edge_adj = make_adj(kad)
    deg = jax.random.uniform(kdeg, (N, 1), jnp.float32, 0.0, 5.0)

    outs = model_forward(params, x1, x2, adj1, adj2, drop_edge_adj, deg)
    outs = jax.block_until_ready(outs)

    h1, h2, h3, h4, beta = outs
    assert h1.shape == (N, HIDDEN) and h2.shape == (N, HIDDEN)
    assert h3.shape == (N, HIDDEN) and h4.shape == (N, HIDDEN)
    assert beta.shape == (N, 1)
    assert all(bool(jnp.all(jnp.isfinite(o))) for o in outs)

    # Correctness check vs. pure-JAX reference.
    with jax.default_matmul_precision("float32"):
        ref = _ref_forward(params, x1, x2, adj1, adj2, drop_edge_adj, deg)
    ref = jax.block_until_ready(ref)
    for got, want in zip(outs, ref):
        assert bool(jnp.allclose(got, want, atol=5e-3, rtol=5e-3)), \
            float(jnp.max(jnp.abs(got - want)))

    print("KERNEL_OK")
</pallas_src>

<mosaic_0001>
module attributes {stable_mosaic.version = 11 : i64} {
  func.func @fused_forward_kernel(%arg0: i32, %arg1: memref<32x32xf32, #tpu.memory_space<vmem>>, %arg2: memref<64x32xf32, #tpu.memory_space<vmem>>, %arg3: memref<64x64xf32, #tpu.memory_space<vmem>>, %arg4: memref<16x1xf32, #tpu.memory_space<vmem>>, %arg5: memref<32x64xf32, #tpu.memory_space<vmem>>, %arg6: memref<1x64xf32, #tpu.memory_space<vmem>>, %arg7: memref<64x32xf32, #tpu.memory_space<vmem>>, %arg8: memref<1x32xf32, #tpu.memory_space<vmem>>, %arg9: memref<32x16xf32, #tpu.memory_space<vmem>>, %arg10: memref<1x16xf32, #tpu.memory_space<vmem>>, %arg11: memref<32x16xf32, #tpu.memory_space<vmem>>, %arg12: memref<1x16xf32, #tpu.memory_space<vmem>>, %arg13: memref<16x1xf32, #tpu.memory_space<vmem>>, %arg14: memref<16x1xf32, #tpu.memory_space<vmem>>, %arg15: memref<3xf32, #tpu.memory_space<smem>>, %arg16: memref<16x128xf32, #tpu.memory_space<vmem>>, %arg17: memref<16x1xf32, #tpu.memory_space<vmem>>) attributes {dimension_semantics = [#tpu.dimension_semantics<arbitrary>], iteration_bounds = array<i64: 1>, scalar_prefetch = 0 : i64, scratch_operands = 0 : i64, tpu.core_type = #tpu.core_type<tc>, window_params = [{pipeline_mode = #tpu.pipeline_mode<synchronous>, transform_indices = @transform_0, window_bounds = array<i64: 32, 32>}, {pipeline_mode = #tpu.pipeline_mode<synchronous>, transform_indices = @transform_1, window_bounds = array<i64: 64, 32>}, {pipeline_mode = #tpu.pipeline_mode<synchronous>, transform_indices = @transform_2, window_bounds = array<i64: 64, 64>}, {pipeline_mode = #tpu.pipeline_mode<synchronous>, transform_indices = @transform_3, window_bounds = array<i64: 16, 1>}, {pipeline_mode = #tpu.pipeline_mode<synchronous>, transform_indices = @transform_4, window_bounds = array<i64: 32, 64>}, {pipeline_mode = #tpu.pipeline_mode<synchronous>, transform_indices = @transform_5, window_bounds = array<i64: 1, 64>}, {pipeline_mode = #tpu.pipeline_mode<synchronous>, transform_indices = @transform_6, window_bounds = array<i64: 64, 32>}, {pipeline_mode = #tpu.pipeline_mode<synchronous>, transform_indices = @transform_7, window_bounds = array<i64: 1, 32>}, {pipeline_mode = #tpu.pipeline_mode<synchronous>, transform_indices = @transform_8, window_bounds = array<i64: 32, 16>}, {pipeline_mode = #tpu.pipeline_mode<synchronous>, transform_indices = @transform_9, window_bounds = array<i64: 1, 16>}, {pipeline_mode = #tpu.pipeline_mode<synchronous>, transform_indices = @transform_10, window_bounds = array<i64: 32, 16>}, {pipeline_mode = #tpu.pipeline_mode<synchronous>, transform_indices = @transform_11, window_bounds = array<i64: 1, 16>}, {pipeline_mode = #tpu.pipeline_mode<synchronous>, transform_indices = @transform_12, window_bounds = array<i64: 16, 1>}, {pipeline_mode = #tpu.pipeline_mode<synchronous>, transform_indices = @transform_13, window_bounds = array<i64: 16, 1>}, {transform_indices = @transform_14, window_bounds = array<i64: 3>}, {pipeline_mode = #tpu.pipeline_mode<synchronous>, transform_indices = @transform_15, window_bounds = array<i64: 16, 128>}, {pipeline_mode = #tpu.pipeline_mode<synchronous>, transform_indices = @transform_16, window_bounds = array<i64: 16, 1>}]} {
    %c0 = arith.constant 0 : index
    %c0_0 = arith.constant 0 : index
    %0 = vector.load %arg1[%c0, %c0_0] : memref<32x32xf32, #tpu.memory_space<vmem>>, vector<32x32xf32>
    %c0_1 = arith.constant 0 : index
    %c0_2 = arith.constant 0 : index
    %1 = vector.load %arg5[%c0_1, %c0_2] : memref<32x64xf32, #tpu.memory_space<vmem>>, vector<32x64xf32>
    %cst = arith.constant dense<0.000000e+00> : vector<32x64xf32>
    %2 = tpu.matmul %0, %1, %cst {dimension_numbers = #tpu.dot_dimension_numbers<[1], [0], [0], [1], [0, 0, 1, 1], [], []>} : vector<32x32xf32>, vector<32x64xf32>, vector<32x64xf32> -> vector<32x64xf32>
    %c0_3 = arith.constant 0 : index
    %c0_4 = arith.constant 0 : index
    %3 = vector.load %arg2[%c0_3, %c0_4] : memref<64x32xf32, #tpu.memory_space<vmem>>, vector<64x32xf32>
    %cst_5 = arith.constant dense<0.000000e+00> : vector<64x64xf32>
    %4 = tpu.matmul %3, %2, %cst_5 {dimension_numbers = #tpu.dot_dimension_numbers<[1], [0], [0], [1], [0, 0, 1, 1], [], []>} : vector<64x32xf32>, vector<32x64xf32>, vector<64x64xf32> -> vector<64x64xf32>
    %c0_6 = arith.constant 0 : index
    %c0_7 = arith.constant 0 : index
    %5 = vector.load %arg6[%c0_6, %c0_7] : memref<1x64xf32, #tpu.memory_space<vmem>>, vector<1x64xf32>
    %6 = vector.broadcast %5 : vector<1x64xf32> to vector<64x64xf32>
    %7 = arith.addf %4, %6 : vector<64x64xf32>
    %cst_8 = arith.constant 0.000000e+00 : f32
    %8 = vector.broadcast %cst_8 : f32 to vector<64x64xf32>
    %9 = arith.maximumf %7, %8 : vector<64x64xf32>
    %c0_9 = arith.constant 0 : index
    %c0_10 = arith.constant 0 : index
    %10 = vector.load %arg7[%c0_9, %c0_10] : memref<64x32xf32, #tpu.memory_space<vmem>>, vector<64x32xf32>
    %cst_11 = arith.constant dense<0.000000e+00> : vector<64x32xf32>
    %11 = tpu.matmul %9, %10, %cst_11 {dimension_numbers = #tpu.dot_dimension_numbers<[1], [0], [0], [1], [0, 0, 1, 1], [], []>} : vector<64x64xf32>, vector<64x32xf32>, vector<64x32xf32> -> vector<64x32xf32>
    %c0_12 = arith.constant 0 : index
    %c0_13 = arith.constant 0 : index
    %12 = vector.load %arg3[%c0_12, %c0_13] : memref<64x64xf32, #tpu.memory_space<vmem>>, vector<64x64xf32>
    %cst_14 = arith.constant dense<0.000000e+00> : vector<64x32xf32>
    %13 = tpu.matmul %12, %11, %cst_14 {dimension_numbers = #tpu.dot_dimension_numbers<[1], [0], [0], [1], [0, 0, 1, 1], [], []>} : vector<64x64xf32>, vector<64x32xf32>, vector<64x32xf32> -> vector<64x32xf32>
    %c0_15 = arith.constant 0 : index
    %c0_16 = arith.constant 0 : index
    %14 = vector.load %arg8[%c0_15, %c0_16] : memref<1x32xf32, #tpu.memory_space<vmem>>, vector<1x32xf32>
    %15 = vector.broadcast %14 : vector<1x32xf32> to vector<64x32xf32>
    %16 = arith.addf %13, %15 : vector<64x32xf32>
    %c0_17 = arith.constant 0 : index
    %17 = memref.load %arg15[%c0_17] : memref<3xf32, #tpu.memory_space<smem>>
    %cst_18 = arith.constant 0.000000e+00 : f32
    %18 = vector.broadcast %cst_18 : f32 to vector<64x32xf32>
    %19 = arith.cmpf ogt, %16, %18 : vector<64x32xf32>
    %20 = vector.broadcast %17 : f32 to vector<64x32xf32>
    %21 = arith.mulf %20, %16 : vector<64x32xf32>
    %22 = arith.select %19, %16, %21 : vector<64x32xi1>, vector<64x32xf32>
    %23 = vector.extract_strided_slice %22 {offsets = [0, 0], sizes = [16, 32], strides = [1, 1]} : vector<64x32xf32> to vector<16x32xf32>
    %24 = vector.extract_strided_slice %22 {offsets = [16, 0], sizes = [16, 32], strides = [1, 1]} : vector<64x32xf32> to vector<16x32xf32>
    %25 = vector.extract_strided_slice %22 {offsets = [32, 0], sizes = [16, 32], strides = [1, 1]} : vector<64x32xf32> to vector<16x32xf32>
    %26 = vector.extract_strided_slice %22 {offsets = [48, 0], sizes = [16, 32], strides = [1, 1]} : vector<64x32xf32> to vector<16x32xf32>
    %27 = tpu.concatenate %23, %24, %25, %26 in 1 : vector<16x32xf32>, vector<16x32xf32>, vector<16x32xf32>, vector<16x32xf32> -> vector<16x128xf32>
    %c0_19 = arith.constant 0 : index
    %c0_20 = arith.constant 0 : index
    %28 = vector.load %arg16[%c0_19, %c0_20] : memref<16x128xf32, #tpu.memory_space<vmem>>, vector<16x128xf32>
    tpu.vector_store %arg16[%c0_19, %c0_20], %27 {strides = array<i32>} : memref<16x128xf32, #tpu.memory_space<vmem>>, vector<16x128xf32>,
    %c0_21 = arith.constant 0 : index
    %c0_22 = arith.constant 0 : index
    %29 = vector.load %arg9[%c0_21, %c0_22] : memref<32x16xf32, #tpu.memory_space<vmem>>, vector<32x16xf32>
    %cst_23 = arith.constant dense<0.000000e+00> : vector<16x16xf32>
    %30 = tpu.matmul %23, %29, %cst_23 {dimension_numbers = #tpu.dot_dimension_numbers<[1], [0], [0], [1], [0, 0, 1, 1], [], []>} : vector<16x32xf32>, vector<32x16xf32>, vector<16x16xf32> -> vector<16x16xf32>
    %c0_24 = arith.constant 0 : index
    %c0_25 = arith.constant 0 : index
    %31 = vector.load %arg10[%c0_24, %c0_25] : memref<1x16xf32, #tpu.memory_space<vmem>>, vector<1x16xf32>
    %32 = vector.broadcast %31 : vector<1x16xf32> to vector<16x16xf32>
    %33 = arith.addf %30, %32 : vector<16x16xf32>
    %c0_26 = arith.constant 0 : index
    %c0_27 = arith.constant 0 : index
    %34 = vector.load %arg11[%c0_26, %c0_27] : memref<32x16xf32, #tpu.memory_space<vmem>>, vector<32x16xf32>
    %cst_28 = arith.constant dense<0.000000e+00> : vector<16x16xf32>
    %35 = tpu.matmul %25, %34, %cst_28 {dimension_numbers = #tpu.dot_dimension_numbers<[1], [0], [0], [1], [0, 0, 1, 1], [], []>} : vector<16x32xf32>, vector<32x16xf32>, vector<16x16xf32> -> vector<16x16xf32>
    %c0_29 = arith.constant 0 : index
    %c0_30 = arith.constant 0 : index
    %36 = vector.load %arg12[%c0_29, %c0_30] : memref<1x16xf32, #tpu.memory_space<vmem>>, vector<1x16xf32>
    %37 = vector.broadcast %36 : vector<1x16xf32> to vector<16x16xf32>
    %38 = arith.addf %35, %37 : vector<16x16xf32>
    %c0_31 = arith.constant 0 : index
    %c0_32 = arith.constant 0 : index
    %39 = vector.load %arg13[%c0_31, %c0_32] : memref<16x1xf32, #tpu.memory_space<vmem>>, vector<16x1xf32>
    %cst_33 = arith.constant dense<0.000000e+00> : vector<16x1xf32>
    %40 = tpu.matmul %33, %39, %cst_33 {dimension_numbers = #tpu.dot_dimension_numbers<[1], [0], [0], [1], [0, 0, 1, 1], [], []>} : vector<16x16xf32>, vector<16x1xf32>, vector<16x1xf32> -> vector<16x1xf32>
    %c0_34 = arith.constant 0 : index
    %c0_35 = arith.constant 0 : index
    %41 = vector.load %arg14[%c0_34, %c0_35] : memref<16x1xf32, #tpu.memory_space<vmem>>, vector<16x1xf32>
    %cst_36 = arith.constant dense<0.000000e+00> : vector<16x1xf32>
    %42 = tpu.matmul %38, %41, %cst_36 {dimension_numbers = #tpu.dot_dimension_numbers<[1], [0], [0], [1], [0, 0, 1, 1], [], []>} : vector<16x16xf32>, vector<16x1xf32>, vector<16x1xf32> -> vector<16x1xf32>
    %43 = arith.addf %40, %42 : vector<16x1xf32>
    %c0_37 = arith.constant 0 : index
    %c0_38 = arith.constant 0 : index
    %44 = vector.load %arg4[%c0_37, %c0_38] : memref<16x1xf32, #tpu.memory_space<vmem>>, vector<16x1xf32>
    %c1 = arith.constant 1 : index
    %45 = memref.load %arg15[%c1] : memref<3xf32, #tpu.memory_space<smem>>
    %46 = vector.broadcast %45 : f32 to vector<16x1xf32>
    %47 = arith.mulf %44, %46 : vector<16x1xf32>
    %48 = arith.addf %43, %47 : vector<16x1xf32>
    %c2 = arith.constant 2 : index
    %49 = memref.load %arg15[%c2] : memref<3xf32, #tpu.memory_space<smem>>
    %50 = vector.broadcast %49 : f32 to vector<16x1xf32>
    %51 = arith.addf %48, %50 : vector<16x1xf32>
    %52 = arith.negf %51 : vector<16x1xf32>
    %53 = math.exp %52 : vector<16x1xf32>
    %cst_39 = arith.constant 1.000000e+00 : f32
    %54 = vector.broadcast %cst_39 : f32 to vector<16x1xf32>
    %55 = arith.addf %54, %53 : vector<16x1xf32>
    %56 = arith.divf %54, %55 : vector<16x1xf32>
    %c0_40 = arith.constant 0 : index
    %c0_41 = arith.constant 0 : index
    %57 = vector.load %arg17[%c0_40, %c0_41] : memref<16x1xf32, #tpu.memory_space<vmem>>, vector<16x1xf32>
    tpu.vector_store %arg17[%c0_40, %c0_41], %56 {strides = array<i32>} : memref<16x1xf32, #tpu.memory_space<vmem>>, vector<16x1xf32>,
    return
  }
  func.func @transform_0(%arg0: i32) -> (i32, i32) {
    %c0_i32 = arith.constant 0 : i32
    %c0_i32_0 = arith.constant 0 : i32
    %c0_i32_1 = arith.constant 0 : i32
    return %c0_i32, %c0_i32_0 : i32, i32
  }
  func.func @transform_1(%arg0: i32) -> (i32, i32) {
    %c0_i32 = arith.constant 0 : i32
    %c0_i32_0 = arith.constant 0 : i32
    %c0_i32_1 = arith.constant 0 : i32
    return %c0_i32, %c0_i32_0 : i32, i32
  }
  func.func @transform_2(%arg0: i32) -> (i32, i32) {
    %c0_i32 = arith.constant 0 : i32
    %c0_i32_0 = arith.constant 0 : i32
    %c0_i32_1 = arith.constant 0 : i32
    return %c0_i32, %c0_i32_0 : i32, i32
  }
  func.func @transform_3(%arg0: i32) -> (i32, i32) {
    %c0_i32 = arith.constant 0 : i32
    %c0_i32_0 = arith.constant 0 : i32
    %c0_i32_1 = arith.constant 0 : i32
    return %c0_i32, %c0_i32_0 : i32, i32
  }
  func.func @transform_4(%arg0: i32) -> (i32, i32) {
    %c0_i32 = arith.constant 0 : i32
    %c0_i32_0 = arith.constant 0 : i32
    %c0_i32_1 = arith.constant 0 : i32
    return %c0_i32, %c0_i32_0 : i32, i32
  }
  func.func @transform_5(%arg0: i32) -> (i32, i32) {
    %c0_i32 = arith.constant 0 : i32
    %c0_i32_0 = arith.constant 0 : i32
    %c0_i32_1 = arith.constant 0 : i32
    return %c0_i32, %c0_i32_0 : i32, i32
  }
  func.func @transform_6(%arg0: i32) -> (i32, i32) {
    %c0_i32 = arith.constant 0 : i32
    %c0_i32_0 = arith.constant 0 : i32
    %c0_i32_1 = arith.constant 0 : i32
    return %c0_i32, %c0_i32_0 : i32, i32
  }
  func.func @transform_7(%arg0: i32) -> (i32, i32) {
    %c0_i32 = arith.constant 0 : i32
    %c0_i32_0 = arith.constant 0 : i32
    %c0_i32_1 = arith.constant 0 : i32
    return %c0_i32, %c0_i32_0 : i32, i32
  }
  func.func @transform_8(%arg0: i32) -> (i32, i32) {
    %c0_i32 = arith.constant 0 : i32
    %c0_i32_0 = arith.constant 0 : i32
    %c0_i32_1 = arith.constant 0 : i32
    return %c0_i32, %c0_i32_0 : i32, i32
  }
  func.func @transform_9(%arg0: i32) -> (i32, i32) {
    %c0_i32 = arith.constant 0 : i32
    %c0_i32_0 = arith.constant 0 : i32
    %c0_i32_1 = arith.constant 0 : i32
    return %c0_i32, %c0_i32_0 : i32, i32
  }
  func.func @transform_10(%arg0: i32) -> (i32, i32) {
    %c0_i32 = arith.constant 0 : i32
    %c0_i32_0 = arith.constant 0 : i32
    %c0_i32_1 = arith.constant 0 : i32
    return %c0_i32, %c0_i32_0 : i32, i32
  }
  func.func @transform_11(%arg0: i32) -> (i32, i32) {
    %c0_i32 = arith.constant 0 : i32
    %c0_i32_0 = arith.constant 0 : i32
    %c0_i32_1 = arith.constant 0 : i32
    return %c0_i32, %c0_i32_0 : i32, i32
  }
  func.func @transform_12(%arg0: i32) -> (i32, i32) {
    %c0_i32 = arith.constant 0 : i32
    %c0_i32_0 = arith.constant 0 : i32
    %c0_i32_1 = arith.constant 0 : i32
    return %c0_i32, %c0_i32_0 : i32, i32
  }
  func.func @transform_13(%arg0: i32) -> (i32, i32) {
    %c0_i32 = arith.constant 0 : i32
    %c0_i32_0 = arith.constant 0 : i32
    %c0_i32_1 = arith.constant 0 : i32
    return %c0_i32, %c0_i32_0 : i32, i32
  }
  func.func @transform_14(%arg0: i32) -> i32 {
    %c0_i32 = arith.constant 0 : i32
    %c0_i32_0 = arith.constant 0 : i32
    return %c0_i32 : i32
  }
  func.func @transform_15(%arg0: i32) -> (i32, i32) {
    %c0_i32 = arith.constant 0 : i32
    %c0_i32_0 = arith.constant 0 : i32
    %c0_i32_1 = arith.constant 0 : i32
    return %c0_i32, %c0_i32_0 : i32, i32
  }
  func.func @transform_16(%arg0: i32) -> (i32, i32) {
    %c0_i32 = arith.constant 0 : i32
    %c0_i32_0 = arith.constant 0 : i32
    %c0_i32_1 = arith.constant 0 : i32
    return %c0_i32, %c0_i32_0 : i32, i32
  }
}

</mosaic_0001>

<llo_original>
// kernel: model_forward.1
$region0: #{model_forward.1}
  #allocation0 [shape = 'u32[]', space=smem, size = 0x4, offset = 0x4, fixed_abs, tag = 'smem constant byte address 0x4 - core index']
  #allocation1 [shape = 'u32[144,128]{1,0:T(1,128)}', space=vmem, size = 0x12000, scoped, tag = 'internal scratch']
  %s0 = inlined_call_operand.vmem [shape: f32[32,32], index: 0, kind: input, shape index: {}]
  %s1 = inlined_call_operand.vmem [shape: f32[64,32], index: 1, kind: input, shape index: {}]
  %s2 = inlined_call_operand.vmem [shape: f32[64,64], index: 2, kind: input, shape index: {}]
  %s3 = inlined_call_operand.vmem [shape: f32[16,1], index: 3, kind: input, shape index: {}]
  %s4 = inlined_call_operand.vmem [shape: f32[32,64], index: 4, kind: input, shape index: {}]
  %s5 = inlined_call_operand.vmem [shape: f32[1,64], index: 5, kind: input, shape index: {}]
  %s6 = inlined_call_operand.vmem [shape: f32[64,32], index: 6, kind: input, shape index: {}]
  %s7 = inlined_call_operand.vmem [shape: f32[1,32], index: 7, kind: input, shape index: {}]
  %s8 = inlined_call_operand.vmem [shape: f32[32,16], index: 8, kind: input, shape index: {}]
  %s9 = inlined_call_operand.vmem [shape: f32[1,16], index: 9, kind: input, shape index: {}]
  %s10 = inlined_call_operand.vmem [shape: f32[32,16], index: 10, kind: input, shape index: {}]
  %s11 = inlined_call_operand.vmem [shape: f32[1,16], index: 11, kind: input, shape index: {}]
  %s12 = inlined_call_operand.vmem [shape: f32[16,1], index: 12, kind: input, shape index: {}]
  %s13 = inlined_call_operand.vmem [shape: f32[16,1], index: 13, kind: input, shape index: {}]
  %s14 = inlined_call_operand.vmem [shape: f32[3], index: 14, kind: input, shape index: {}]
  %s15 = inlined_call_operand.vmem [shape: f32[16,128], index: 15, kind: output, shape index: {0}]
  %s16 = inlined_call_operand.vmem [shape: f32[16,1], index: 16, kind: output, shape index: {1}]
  %17 = xla_tuple %s15, %s16
  %s18 = sld [smem:[#allocation0]]
  $region82: #{model_forward.1} parent=0
    _
  %s20 = ssub.s32 1, %s18
  %s21 = scalar_select 0, %s20, %s18
  $region1: #{model_forward.1} parent=0
    #allocation2 [shape = 'u8[512]{0}', space=smem, size = 0x200, scoped, tag = 'input window, operand 14, single buffered']
    #allocation3 [shape = 's32[1]{0}', space=sflag, size = 0x4, scoped, tag = 'scoped memory for model_forward.1']
    %22 = vsyncpa [#allocation3], 0
    // Predicated region
    $region2: #{model_forward.1} parent=1 // pred_check
      _
    $region3: #{model_forward.1} parent=1 // pred_check_branch
      %24 = sbr.rel (0) target = $region5
    $region4: #{model_forward.1} parent=1 // pred_region
      _
    $region5: #{model_forward.1} parent=1 // pred_fallthru
      _
    // Predicated region
    $region6: #{model_forward.1} parent=1 // pred_check
      _
    $region7: #{model_forward.1} parent=1 // pred_check_branch
      %26 = sbr.rel (0) target = $region9
    $region8: #{model_forward.1} parent=1 // pred_region
      _
    $region9: #{model_forward.1} parent=1 // pred_fallthru
      _
    // Predicated region
    $region10: #{model_forward.1} parent=1 // pred_check
      _
    $region11: #{model_forward.1} parent=1 // pred_check_branch
      %28 = sbr.rel (0) target = $region13
    $region12: #{model_forward.1} parent=1 // pred_region
      _
    $region13: #{model_forward.1} parent=1 // pred_fallthru
      _
    // Predicated region
    $region14: #{model_forward.1} parent=1 // pred_check
      _
    $region15: #{model_forward.1} parent=1 // pred_check_branch
      %30 = sbr.rel (0) target = $region17
    $region16: #{model_forward.1} parent=1 // pred_region
      _
    $region17: #{model_forward.1} parent=1 // pred_fallthru
      _
    // Predicated region
    $region18: #{model_forward.1} parent=1 // pred_check
      _
    $region19: #{model_forward.1} parent=1 // pred_check_branch
      %32 = sbr.rel (0) target = $region21
    $region20: #{model_forward.1} parent=1 // pred_region
      _
    $region21: #{model_forward.1} parent=1 // pred_fallthru
      _
    // Predicated region
    $region22: #{model_forward.1} parent=1 // pred_check
      _
    $region23: #{model_forward.1} parent=1 // pred_check_branch
      %34 = sbr.rel (0) target = $region25
    $region24: #{model_forward.1} parent=1 // pred_region
      _
    $region25: #{model_forward.1} parent=1 // pred_fallthru
      _
    // Predicated region
    $region26: #{model_forward.1} parent=1 // pred_check
      _
    $region27: #{model_forward.1} parent=1 // pred_check_branch
      %36 = sbr.rel (0) target = $region29
    $region28: #{model_forward.1} parent=1 // pred_region
      _
    $region29: #{model_forward.1} parent=1 // pred_fallthru
      _
    // Predicated region
    $region30: #{model_forward.1} parent=1 // pred_check
      _
    $region31: #{model_forward.1} parent=1 // pred_check_branch
      %38 = sbr.rel (0) target = $region33
    $region32: #{model_forward.1} parent=1 // pred_region
      _
    $region33: #{model_forward.1} parent=1 // pred_fallthru
      _
    // Predicated region
    $region34: #{model_forward.1} parent=1 // pred_check
      _
    $region35: #{model_forward.1} parent=1 // pred_check_branch
      %40 = sbr.rel (0) target = $region37
    $region36: #{model_forward.1} parent=1 // pred_region
      _
    $region37: #{model_forward.1} parent=1 // pred_fallthru
      _
    // Predicated region
    $region38: #{model_forward.1} parent=1 // pred_check
      _
    $region39: #{model_forward.1} parent=1 // pred_check_branch
      %42 = sbr.rel (0) target = $region41
    $region40: #{model_forward.1} parent=1 // pred_region
      _
    $region41: #{model_forward.1} parent=1 // pred_fallthru
      _
    // Predicated region
    $region42: #{model_forward.1} parent=1 // pred_check
      _
    $region43: #{model_forward.1} parent=1 // pred_check_branch
      %44 = sbr.rel (0) target = $region45
    $region44: #{model_forward.1} parent=1 // pred_region
      _
    $region45: #{model_forward.1} parent=1 // pred_fallthru
      _
    // Predicated region
    $region46: #{model_forward.1} parent=1 // pred_check
      _
    $region47: #{model_forward.1} parent=1 // pred_check_branch
      %46 = sbr.rel (0) target = $region49
    $region48: #{model_forward.1} parent=1 // pred_region
      _
    $region49: #{model_forward.1} parent=1 // pred_fallthru
      _
    // Predicated region
    $region50: #{model_forward.1} parent=1 // pred_check
      _
    $region51: #{model_forward.1} parent=1 // pred_check_branch
      %48 = sbr.rel (0) target = $region53
    $region52: #{model_forward.1} parent=1 // pred_region
      _
    $region53: #{model_forward.1} parent=1 // pred_fallthru
      _
    // Predicated region
    $region54: #{model_forward.1} parent=1 // pred_check
      _
    $region55: #{model_forward.1} parent=1 // pred_check_branch
      %50 = sbr.rel (0) target = $region57
    $region56: #{model_forward.1} parent=1 // pred_region
      _
    $region57: #{model_forward.1} parent=1 // pred_fallthru
      _
    // Predicated region
    $region58: #{model_forward.1} parent=1 // pred_check
      _
    $region59: #{model_forward.1} parent=1 // pred_check_branch
      %52 = sbr.rel (0) target = $region61
    $region60: #{model_forward.1} parent=1 // pred_region
      %s54 = ssub.s32 16, 16
      %55 = vsyncadd [#allocation3], %s54
      %s57 = sshll.u32 %s14, 4
      %s58 = int_to_ptr.vmem [resolvable:$true] %s57
      %60 = dma.vmem_to_smem %s58, 16, [#allocation2], [#allocation3]
    $region61: #{model_forward.1} parent=1 // pred_fallthru
      _
    // Predicated region
    $region62: #{model_forward.1} parent=1 // pred_check
      _
    $region63: #{model_forward.1} parent=1 // pred_check_branch
      %62 = sbr.rel (0) target = $region65
    $region64: #{model_forward.1} parent=1 // pred_region
      %63 = dma.done [#allocation3], 16
    $region65: #{model_forward.1} parent=1 // pred_fallthru
      _
    %64 = sfence
    %v65 = vld [vmem:[%s0] sm:$0xff]
    %v66 = vld [vmem:[%s0 + $0x8] sm:$0xff]
    %v67 = vld [vmem:[%s0 + $0x10] sm:$0xff]
    %v68 = vld [vmem:[%s0 + $0x18] sm:$0xff]
    %v69 = vld [vmem:[%s4] sm:$0xff]
    %v70 = vld [vmem:[%s4 + $0x8] sm:$0xff]
    %v71 = vld [vmem:[%s4 + $0x10] sm:$0xff]
    %v72 = vld [vmem:[%s4 + $0x18] sm:$0xff]
    %vm73 = vcmask 261120
    %v75 = vsel %vm73, %v65, 0
    %v78 = vsel %vm73, %v66, 0
    %v81 = vsel %vm73, %v67, 0
    %v84 = vsel %vm73, %v68, 0
    %86 = vmatprep.subr.mxu0 0.0
    %87 = vmatpush1.msra.mxu0 %v69
    %88 = vmatprep.subr.mxu0 0.0
    %89 = vmatpush1.msra.mxu0 %v70
    %90 = vmatprep.subr.mxu0 0.0
    %91 = vmatpush1.msra.mxu0 %v71
    %92 = vmatprep.subr.mxu0 0.0
    %93 = vmatpush1.msra.mxu0 %v72
    %94 = vmatprep.subr.mxu0 0.0
    %95 = vmatpush1.msra.mxu0 0.0
    %96 = vmatprep.subr.mxu0 0.0
    %97 = vmatpush1.msra.mxu0 0.0
    %98 = vmatprep.subr.mxu0 0.0
    %99 = vmatpush1.msra.mxu0 0.0
    %100 = vmatprep.subr.mxu0 0.0
    %101 = vmatpush1.msra.mxu0 0.0
    %102 = vmatprep.subr.mxu0 0.0
    %103 = vmatpush1.msra.mxu0 0.0
    %104 = vmatprep.subr.mxu0 0.0
    %105 = vmatpush1.msra.mxu0 0.0
    %106 = vmatprep.subr.mxu0 0.0
    %107 = vmatpush1.msra.mxu0 0.0
    %108 = vmatprep.subr.mxu0 0.0
    %109 = vmatpush1.msra.mxu0 0.0
    %110 = vmatprep.subr.mxu0 0.0
    %111 = vmatpush1.msra.mxu0 0.0
    %112 = vmatprep.subr.mxu0 0.0
    %113 = vmatpush1.msra.mxu0 0.0
    %114 = vmatprep.subr.mxu0 0.0
    %115 = vmatpush1.msra.mxu0 0.0
    %116 = vmatprep.subr.mxu0 0.0
    %117 = vmatpush1.msra.mxu0 0.0
    %118 = vmatprep.subr.mxu0 0.0
    %119 = vmatpush1.msra.mxu0 0.0
    %120 = vmatprep.subr.mxu0 0.0
    %121 = vmatpush1.msra.mxu0 0.0
    %122 = vmatprep.subr.mxu0 0.0
    %123 = vmatpush1.msra.mxu0 0.0
    %124 = vmatprep.subr.mxu0 0.0
    %125 = vmatpush1.msra.mxu0 0.0
    %126 = vmatprep.subr.mxu0 0.0
    %127 = vmatpush1.msra.mxu0 0.0
    %128 = vmatprep.subr.mxu0 0.0
    %129 = vmatpush1.msra.mxu0 0.0
    %130 = vmatprep.subr.mxu0 0.0
    %131 = vmatpush1.msra.mxu0 0.0
    %132 = vmatprep.subr.mxu0 0.0
    %133 = vmatpush1.msra.mxu0 0.0
    %134 = vmatprep.subr.mxu0 0.0
    %135 = vmatpush1.msra.mxu0 0.0
    %136 = vmatprep.subr.mxu0 0.0
    %137 = vmatpush1.msra.mxu0 0.0
    %138 = vmatprep.subr.mxu0 0.0
    %139 = vmatpush1.msra.mxu0 0.0
    %140 = vmatprep.subr.mxu0 0.0
    %141 = vmatpush1.msra.mxu0 0.0
    %142 = vmatprep.subr.mxu0 0.0
    %143 = vmatpush1.msra.mxu0 0.0
    %144 = vmatprep.subr.mxu0 0.0
    %145 = vmatpush1.msra.mxu0 0.0
    %146 = vmatprep.subr.mxu0 0.0
    %147 = vmatpush1.msra.mxu0 0.0
    %148 = vmatprep.subr.mxu0 0.0
    %149 = vmatpush1.msra.mxu0 0.0
    %150 = vmatprep.mubr.f32.mxu0 0.0
    %151 = vmatmul.mubr.f32.gmra.mrb[0].mxu0 %v75
    %v152 = vpop.f32.mrb[0].mxu0
    %v153 = vadd.f32 0.0, %v152
    %v154 = vpop.f32.mrb[0].mxu0
    %155 = vmatprep.mubr.f32.mxu0 0.0
    %156 = vmatmul.mubr.f32.gmra.mrb[0].mxu0 %v78
    %v157 = vpop.f32.mrb[0].mxu0
    %v158 = vadd.f32 0.0, %v157
    %v159 = vpop.f32.mrb[0].mxu0
    %160 = vmatprep.mubr.f32.mxu0 0.0
    %161 = vmatmul.mubr.f32.gmra.mrb[0].mxu0 %v81
    %v162 = vpop.f32.mrb[0].mxu0
    %v163 = vadd.f32 0.0, %v162
    %v164 = vpop.f32.mrb[0].mxu0
    %165 = vmatprep.mubr.f32.mxu0 0.0
    %166 = vmatmul.mubr.f32.gmra.mrb[0].mxu0 %v84
    %v167 = vpop.f32.mrb[0].mxu0
    %v168 = vadd.f32 0.0, %v167
    %v169 = vpop.f32.mrb[0].mxu0
    %170 = vdwg.mxu0
    %v171 = vld [vmem:[%s1] sm:$0xff]
    %v172 = vld [vmem:[%s1 + $0x8] sm:$0xff]
    %v173 = vld [vmem:[%s1 + $0x10] sm:$0xff]
    %v174 = vld [vmem:[%s1 + $0x18] sm:$0xff]
    %v175 = vld [vmem:[%s1 + $0x20] sm:$0xff]
    %v176 = vld [vmem:[%s1 + $0x28] sm:$0xff]
    %v177 = vld [vmem:[%s1 + $0x30] sm:$0xff]
    %v178 = vld [vmem:[%s1 + $0x38] sm:$0xff]
    %v179 = vld [vmem:[%s5] sm:$0x1]
    %v181 = vlaneseq
    %v182 = vshrl.u32 %v181, 7
    %v183 = vsub.s32 0, %v182
    %v184 = vrot.slane %v179, %v183
    %v187 = vsel %vm73, %v171, 0
    %v190 = vsel %vm73, %v172, 0
    %v193 = vsel %vm73, %v173, 0
    %v196 = vsel %vm73, %v174, 0
    %v199 = vsel %vm73, %v175, 0
    %v202 = vsel %vm73, %v176, 0
    %v205 = vsel %vm73, %v177, 0
    %v208 = vsel %vm73, %v178, 0
    %210 = vmatprep.subr.mxu0 0.0
    %211 = vmatpush1.msra.mxu0 %v153
    %212 = vmatprep.subr.mxu0 0.0
    %213 = vmatpush1.msra.mxu0 %v158
    %214 = vmatprep.subr.mxu0 0.0
    %215 = vmatpush1.msra.mxu0 %v163
    %216 = vmatprep.subr.mxu0 0.0
    %217 = vmatpush1.msra.mxu0 %v168
    %218 = vmatprep.subr.mxu0 0.0
    %219 = vmatpush1.msra.mxu0 0.0
    %220 = vmatprep.subr.mxu0 0.0
    %221 = vmatpush1.msra.mxu0 0.0
    %222 = vmatprep.subr.mxu0 0.0
    %223 = vmatpush1.msra.mxu0 0.0
    %224 = vmatprep.subr.mxu0 0.0
    %225 = vmatpush1.msra.mxu0 0.0
    %226 = vmatprep.subr.mxu0 0.0
    %227 = vmatpush1.msra.mxu0 0.0
    %228 = vmatprep.subr.mxu0 0.0
    %229 = vmatpush1.msra.mxu0 0.0
    %230 = vmatprep.subr.mxu0 0.0
    %231 = vmatpush1.msra.mxu0 0.0
    %232 = vmatprep.subr.mxu0 0.0
    %233 = vmatpush1.msra.mxu0 0.0
    %234 = vmatprep.subr.mxu0 0.0
    %235 = vmatpush1.msra.mxu0 0.0
    %236 = vmatprep.subr.mxu0 0.0
    %237 = vmatpush1.msra.mxu0 0.0
    %238 = vmatprep.subr.mxu0 0.0
    %239 = vmatpush1.msra.mxu0 0.0
    %240 = vmatprep.subr.mxu0 0.0
    %241 = vmatpush1.msra.mxu0 0.0
    %242 = vmatprep.subr.mxu0 0.0
    %243 = vmatpush1.msra.mxu0 0.0
    %244 = vmatprep.subr.mxu0 0.0
    %245 = vmatpush1.msra.mxu0 0.0
    %246 = vmatprep.subr.mxu0 0.0
    %247 = vmatpush1.msra.mxu0 0.0
    %248 = vmatprep.subr.mxu0 0.0
    %249 = vmatpush1.msra.mxu0 0.0
    %250 = vmatprep.subr.mxu0 0.0
    %251 = vmatpush1.msra.mxu0 0.0
    %252 = vmatprep.subr.mxu0 0.0
    %253 = vmatpush1.msra.mxu0 0.0
    %254 = vmatprep.subr.mxu0 0.0
    %255 = vmatpush1.msra.mxu0 0.0
    %256 = vmatprep.subr.mxu0 0.0
    %257 = vmatpush1.msra.mxu0 0.0
    %258 = vmatprep.subr.mxu0 0.0
    %259 = vmatpush1.msra.mxu0 0.0
    %260 = vmatprep.subr.mxu0 0.0
    %261 = vmatpush1.msra.mxu0 0.0
    %262 = vmatprep.subr.mxu0 0.0
    %263 = vmatpush1.msra.mxu0 0.0
    %264 = vmatprep.subr.mxu0 0.0
    %265 = vmatpush1.msra.mxu0 0.0
    %266 = vmatprep.subr.mxu0 0.0
    %267 = vmatpush1.msra.mxu0 0.0
    %268 = vmatprep.subr.mxu0 0.0
    %269 = vmatpush1.msra.mxu0 0.0
    %270 = vmatprep.subr.mxu0 0.0
    %271 = vmatpush1.msra.mxu0 0.0
    %272 = vmatprep.subr.mxu0 0.0
    %273 = vmatpush1.msra.mxu0 0.0
    %274 = vmatprep.mubr.f32.mxu0 0.0
    %275 = vmatmul.mubr.f32.gmra.mrb[0].mxu0 %v187
    %v276 = vpop.f32.mrb[0].mxu0
    %v277 = vadd.f32 %v184, %v276
    %v278 = vpop.f32.mrb[0].mxu0
    %279 = vmatprep.mubr.f32.mxu0 0.0
    %280 = vmatmul.mubr.f32.gmra.mrb[0].mxu0 %v190
    %v281 = vpop.f32.mrb[0].mxu0
    %v282 = vadd.f32 %v184, %v281
    %v283 = vpop.f32.mrb[0].mxu0
    %284 = vmatprep.mubr.f32.mxu0 0.0
    %285 = vmatmul.mubr.f32.gmra.mrb[0].mxu0 %v193
    %v286 = vpop.f32.mrb[0].mxu0
    %v287 = vadd.f32 %v184, %v286
    %v288 = vpop.f32.mrb[0].mxu0
    %289 = vmatprep.mubr.f32.mxu0 0.0
    %290 = vmatmul.mubr.f32.gmra.mrb[0].mxu0 %v196
    %v291 = vpop.f32.mrb[0].mxu0
    %v292 = vadd.f32 %v184, %v291
    %v293 = vpop.f32.mrb[0].mxu0
    %294 = vmatprep.mubr.f32.mxu0 0.0
    %295 = vmatmul.mubr.f32.gmra.mrb[0].mxu0 %v199
    %v296 = vpop.f32.mrb[0].mxu0
    %v297 = vadd.f32 %v184, %v296
    %v298 = vpop.f32.mrb[0].mxu0
    %299 = vmatprep.mubr.f32.mxu0 0.0
    %300 = vmatmul.mubr.f32.gmra.mrb[0].mxu0 %v202
    %v301 = vpop.f32.mrb[0].mxu0
    %v302 = vadd.f32 %v184, %v301
    %v303 = vpop.f32.mrb[0].mxu0
    %304 = vmatprep.mubr.f32.mxu0 0.0
    %305 = vmatmul.mubr.f32.gmra.mrb[0].mxu0 %v205
    %v306 = vpop.f32.mrb[0].mxu0
    %v307 = vadd.f32 %v184, %v306
    %v308 = vpop.f32.mrb[0].mxu0
    %309 = vmatprep.mubr.f32.mxu0 0.0
    %310 = vmatmul.mubr.f32.gmra.mrb[0].mxu0 %v208
    %v311 = vpop.f32.mrb[0].mxu0
    %v312 = vadd.f32 %v184, %v311
    %v313 = vpop.f32.mrb[0].mxu0
    %314 = vdwg.mxu0
    %v315 = vmax.f32 %v277, 0.0
    %v316 = vmax.f32 %v282, 0.0
    %v317 = vmax.f32 %v287, 0.0
    %v318 = vmax.f32 %v292, 0.0
    %v319 = vmax.f32 %v297, 0.0
    %v320 = vmax.f32 %v302, 0.0
    %v321 = vmax.f32 %v307, 0.0
    %v322 = vmax.f32 %v312, 0.0
    %v323 = vld [vmem:[%s6] sm:$0xff]
    %v324 = vld [vmem:[%s6 + $0x8] sm:$0xff]
    %v325 = vld [vmem:[%s6 + $0x10] sm:$0xff]
    %v326 = vld [vmem:[%s6 + $0x18] sm:$0xff]
    %v327 = vld [vmem:[%s6 + $0x20] sm:$0xff]
    %v328 = vld [vmem:[%s6 + $0x28] sm:$0xff]
    %v329 = vld [vmem:[%s6 + $0x30] sm:$0xff]
    %v330 = vld [vmem:[%s6 + $0x38] sm:$0xff]
    %vm331 = vcmask 523264
    %v333 = vsel %vm331, %v315, 0
    %v336 = vsel %vm331, %v316, 0
    %v339 = vsel %vm331, %v317, 0
    %v342 = vsel %vm331, %v318, 0
    %v345 = vsel %vm331, %v319, 0
    %v348 = vsel %vm331, %v320, 0
    %v351 = vsel %vm331, %v321, 0
    %v354 = vsel %vm331, %v322, 0
    %356 = vmatprep.subr.mxu0 0.0
    %357 = vmatpush1.msra.mxu0 %v323
    %358 = vmatprep.subr.mxu0 0.0
    %359 = vmatpush1.msra.mxu0 %v324
    %360 = vmatprep.subr.mxu0 0.0
    %361 = vmatpush1.msra.mxu0 %v325
    %362 = vmatprep.subr.mxu0 0.0
    %363 = vmatpush1.msra.mxu0 %v326
    %364 = vmatprep.subr.mxu0 0.0
    %365 = vmatpush1.msra.mxu0 %v327
    %366 = vmatprep.subr.mxu0 0.0
    %367 = vmatpush1.msra.mxu0 %v328
    %368 = vmatprep.subr.mxu0 0.0
    %369 = vmatpush1.msra.mxu0 %v329
    %370 = vmatprep.subr.mxu0 0.0
    %371 = vmatpush1.msra.mxu0 %v330
    %372 = vmatprep.subr.mxu0 0.0
    %373 = vmatpush1.msra.mxu0 0.0
    %374 = vmatprep.subr.mxu0 0.0
    %375 = vmatpush1.msra.mxu0 0.0
    %376 = vmatprep.subr.mxu0 0.0
    %377 = vmatpush1.msra.mxu0 0.0
    %378 = vmatprep.subr.mxu0 0.0
    %379 = vmatpush1.msra.mxu0 0.0
    %380 = vmatprep.subr.mxu0 0.0
    %381 = vmatpush1.msra.mxu0 0.0
    %382 = vmatprep.subr.mxu0 0.0
    %383 = vmatpush1.msra.mxu0 0.0
    %384 = vmatprep.subr.mxu0 0.0
    %385 = vmatpush1.msra.mxu0 0.0
    %386 = vmatprep.subr.mxu0 0.0
    %387 = vmatpush1.msra.mxu0 0.0
    %388 = vmatprep.subr.mxu0 0.0
    %389 = vmatpush1.msra.mxu0 0.0
    %390 = vmatprep.subr.mxu0 0.0
    %391 = vmatpush1.msra.mxu0 0.0
    %392 = vmatprep.subr.mxu0 0.0
    %393 = vmatpush1.msra.mxu0 0.0
    %394 = vmatprep.subr.mxu0 0.0
    %395 = vmatpush1.msra.mxu0 0.0
    %396 = vmatprep.subr.mxu0 0.0
    %397 = vmatpush1.msra.mxu0 0.0
    %398 = vmatprep.subr.mxu0 0.0
    %399 = vmatpush1.msra.mxu0 0.0
    %400 = vmatprep.subr.mxu0 0.0
    %401 = vmatpush1.msra.mxu0 0.0
    %402 = vmatprep.subr.mxu0 0.0
    %403 = vmatpush1.msra.mxu0 0.0
    %404 = vmatprep.subr.mxu0 0.0
    %405 = vmatpush1.msra.mxu0 0.0
    %406 = vmatprep.subr.mxu0 0.0
    %407 = vmatpush1.msra.mxu0 0.0
    %408 = vmatprep.subr.mxu0 0.0
    %409 = vmatpush1.msra.mxu0 0.0
    %410 = vmatprep.subr.mxu0 0.0
    %411 = vmatpush1.msra.mxu0 0.0
    %412 = vmatprep.subr.mxu0 0.0
    %413 = vmatpush1.msra.mxu0 0.0
    %414 = vmatprep.subr.mxu0 0.0
    %415 = vmatpush1.msra.mxu0 0.0
    %416 = vmatprep.subr.mxu0 0.0
    %417 = vmatpush1.msra.mxu0 0.0
    %418 = vmatprep.subr.mxu0 0.0
    %419 = vmatpush1.msra.mxu0 0.0
    %420 = vmatprep.mubr.f32.mxu0 0.0
    %421 = vmatmul.mubr.f32.gmra.mrb[0].mxu0 %v333
    %v422 = vpop.f32.mrb[0].mxu0
    %v423 = vadd.f32 0.0, %v422
    %v424 = vpop.f32.mrb[0].mxu0
    %425 = vmatprep.mubr.f32.mxu0 0.0
    %426 = vmatmul.mubr.f32.gmra.mrb[0].mxu0 %v336
    %v427 = vpop.f32.mrb[0].mxu0
    %v428 = vadd.f32 0.0, %v427
    %v429 = vpop.f32.mrb[0].mxu0
    %430 = vmatprep.mubr.f32.mxu0 0.0
    %431 = vmatmul.mubr.f32.gmra.mrb[0].mxu0 %v339
    %v432 = vpop.f32.mrb[0].mxu0
    %v433 = vadd.f32 0.0, %v432
    %v434 = vpop.f32.mrb[0].mxu0
    %435 = vmatprep.mubr.f32.mxu0 0.0
    %436 = vmatmul.mubr.f32.gmra.mrb[0].mxu0 %v342
    %v437 = vpop.f32.mrb[0].mxu0
    %v438 = vadd.f32 0.0, %v437
    %v439 = vpop.f32.mrb[0].mxu0
    %440 = vmatprep.mubr.f32.mxu0 0.0
    %441 = vmatmul.mubr.f32.gmra.mrb[0].mxu0 %v345
    %v442 = vpop.f32.mrb[0].mxu0
    %v443 = vadd.f32 0.0, %v442
    %v444 = vpop.f32.mrb[0].mxu0
    %445 = vmatprep.mubr.f32.mxu0 0.0
    %446 = vmatmul.mubr.f32.gmra.mrb[0].mxu0 %v348
    %v447 = vpop.f32.mrb[0].mxu0
    %v448 = vadd.f32 0.0, %v447
    %v449 = vpop.f32.mrb[0].mxu0
    %450 = vmatprep.mubr.f32.mxu0 0.0
    %451 = vmatmul.mubr.f32.gmra.mrb[0].mxu0 %v351
    %v452 = vpop.f32.mrb[0].mxu0
    %v453 = vadd.f32 0.0, %v452
    %v454 = vpop.f32.mrb[0].mxu0
    %455 = vmatprep.mubr.f32.mxu0 0.0
    %456 = vmatmul.mubr.f32.gmra.mrb[0].mxu0 %v354
    %v457 = vpop.f32.mrb[0].mxu0
    %v458 = vadd.f32 0.0, %v457
    %v459 = vpop.f32.mrb[0].mxu0
    %460 = vdwg.mxu0
    %v461 = vld [vmem:[%s2] sm:$0xff]
    %v462 = vld [vmem:[%s2 + $0x8] sm:$0xff]
    %v463 = vld [vmem:[%s2 + $0x10] sm:$0xff]
    %v464 = vld [vmem:[%s2 + $0x18] sm:$0xff]
    %v465 = vld [vmem:[%s2 + $0x20] sm:$0xff]
    %v466 = vld [vmem:[%s2 + $0x28] sm:$0xff]
    %v467 = vld [vmem:[%s2 + $0x30] sm:$0xff]
    %v468 = vld [vmem:[%s2 + $0x38] sm:$0xff]
    %v469 = vld [vmem:[%s7] sm:$0x1]
    %v471 = vlaneseq
    %v472 = vshrl.u32 %v471, 7
    %v473 = vsub.s32 0, %v472
    %v474 = vrot.slane %v469, %v473
    %v477 = vsel %vm331, %v461, 0
    %v480 = vsel %vm331, %v462, 0
    %v483 = vsel %vm331, %v463, 0
    %v486 = vsel %vm331, %v464, 0
    %v489 = vsel %vm331, %v465, 0
    %v492 = vsel %vm331, %v466, 0
    %v495 = vsel %vm331, %v467, 0
    %v498 = vsel %vm331, %v468, 0
    %500 = vmatprep.subr.mxu0 0.0
    %501 = vmatpush1.msra.mxu0 %v423
    %502 = vmatprep.subr.mxu0 0.0
    %503 = vmatpush1.msra.mxu0 %v428
    %504 = vmatprep.subr.mxu0 0.0
    %505 = vmatpush1.msra.mxu0 %v433
    %506 = vmatprep.subr.mxu0 0.0
    %507 = vmatpush1.msra.mxu0 %v438
    %508 = vmatprep.subr.mxu0 0.0
    %509 = vmatpush1.msra.mxu0 %v443
    %510 = vmatprep.subr.mxu0 0.0
    %511 = vmatpush1.msra.mxu0 %v448
    %512 = vmatprep.subr.mxu0 0.0
    %513 = vmatpush1.msra.mxu0 %v453
    %514 = vmatprep.subr.mxu0 0.0
    %515 = vmatpush1.msra.mxu0 %v458
    %516 = vmatprep.subr.mxu0 0.0
    %517 = vmatpush1.msra.mxu0 0.0
    %518 = vmatprep.subr.mxu0 0.0
    %519 = vmatpush1.msra.mxu0 0.0
    %520 = vmatprep.subr.mxu0 0.0
    %521 = vmatpush1.msra.mxu0 0.0
    %522 = vmatprep.subr.mxu0 0.0
    %523 = vmatpush1.msra.mxu0 0.0
    %524 = vmatprep.subr.mxu0 0.0
    %525 = vmatpush1.msra.mxu0 0.0
    %526 = vmatprep.subr.mxu0 0.0
    %527 = vmatpush1.msra.mxu0 0.0
    %528 = vmatprep.subr.mxu0 0.0
    %529 = vmatpush1.msra.mxu0 0.0
    %530 = vmatprep.subr.mxu0 0.0
    %531 = vmatpush1.msra.mxu0 0.0
    %532 = vmatprep.subr.mxu0 0.0
    %533 = vmatpush1.msra.mxu0 0.0
    %534 = vmatprep.subr.mxu0 0.0
    %535 = vmatpush1.msra.mxu0 0.0
    %536 = vmatprep.subr.mxu0 0.0
    %537 = vmatpush1.msra.mxu0 0.0
    %538 = vmatprep.subr.mxu0 0.0
    %539 = vmatpush1.msra.mxu0 0.0
    %540 = vmatprep.subr.mxu0 0.0
    %541 = vmatpush1.msra.mxu0 0.0
    %542 = vmatprep.subr.mxu0 0.0
    %543 = vmatpush1.msra.mxu0 0.0
    %544 = vmatprep.subr.mxu0 0.0
    %545 = vmatpush1.msra.mxu0 0.0
    %546 = vmatprep.subr.mxu0 0.0
    %547 = vmatpush1.msra.mxu0 0.0
    %548 = vmatprep.subr.mxu0 0.0
    %549 = vmatpush1.msra.mxu0 0.0
    %550 = vmatprep.subr.mxu0 0.0
    %551 = vmatpush1.msra.mxu0 0.0
    %552 = vmatprep.subr.mxu0 0.0
    %553 = vmatpush1.msra.mxu0 0.0
    %554 = vmatprep.subr.mxu0 0.0
    %555 = vmatpush1.msra.mxu0 0.0
    %556 = vmatprep.subr.mxu0 0.0
    %557 = vmatpush1.msra.mxu0 0.0
    %558 = vmatprep.subr.mxu0 0.0
    %559 = vmatpush1.msra.mxu0 0.0
    %560 = vmatprep.subr.mxu0 0.0
    %561 = vmatpush1.msra.mxu0 0.0
    %562 = vmatprep.subr.mxu0 0.0
    %563 = vmatpush1.msra.mxu0 0.0
    %564 = vmatprep.mubr.f32.mxu0 0.0
    %565 = vmatmul.mubr.f32.gmra.mrb[0].mxu0 %v477
    %v566 = vpop.f32.mrb[0].mxu0
    %v567 = vadd.f32 %v474, %v566
    %v568 = vpop.f32.mrb[0].mxu0
    %569 = vmatprep.mubr.f32.mxu0 0.0
    %570 = vmatmul.mubr.f32.gmra.mrb[0].mxu0 %v480
    %v571 = vpop.f32.mrb[0].mxu0
    %v572 = vadd.f32 %v474, %v571
    %v573 = vpop.f32.mrb[0].mxu0
    %574 = vmatprep.mubr.f32.mxu0 0.0
    %575 = vmatmul.mubr.f32.gmra.mrb[0].mxu0 %v483
    %v576 = vpop.f32.mrb[0].mxu0
    %v577 = vadd.f32 %v474, %v576
    %v578 = vpop.f32.mrb[0].mxu0
    %579 = vmatprep.mubr.f32.mxu0 0.0
    %580 = vmatmul.mubr.f32.gmra.mrb[0].mxu0 %v486
    %v581 = vpop.f32.mrb[0].mxu0
    %v582 = vadd.f32 %v474, %v581
    %v583 = vpop.f32.mrb[0].mxu0
    %584 = vmatprep.mubr.f32.mxu0 0.0
    %585 = vmatmul.mubr.f32.gmra.mrb[0].mxu0 %v489
    %v586 = vpop.f32.mrb[0].mxu0
    %v587 = vadd.f32 %v474, %v586
    %v588 = vpop.f32.mrb[0].mxu0
    %589 = vmatprep.mubr.f32.mxu0 0.0
    %590 = vmatmul.mubr.f32.gmra.mrb[0].mxu0 %v492
    %v591 = vpop.f32.mrb[0].mxu0
    %v592 = vadd.f32 %v474, %v591
    %v593 = vpop.f32.mrb[0].mxu0
    %594 = vmatprep.mubr.f32.mxu0 0.0
    %595 = vmatmul.mubr.f32.gmra.mrb[0].mxu0 %v495
    %v596 = vpop.f32.mrb[0].mxu0
    %v597 = vadd.f32 %v474, %v596
    %v598 = vpop.f32.mrb[0].mxu0
    %599 = vmatprep.mubr.f32.mxu0 0.0
    %600 = vmatmul.mubr.f32.gmra.mrb[0].mxu0 %v498
    %v601 = vpop.f32.mrb[0].mxu0
    %v602 = vadd.f32 %v474, %v601
    %v603 = vpop.f32.mrb[0].mxu0
    %604 = vdwg.mxu0
    %s605 = sld [smem:[#allocation2]]
    %vm606 = vcmp.gt.f32.partialorder %v567, 0.0
    %vm607 = vcmp.gt.f32.partialorder %v572, 0.0
    %vm608 = vcmp.gt.f32.partialorder %v577, 0.0
    %vm609 = vcmp.gt.f32.partialorder %v582, 0.0
    %vm610 = vcmp.gt.f32.partialorder %v587, 0.0
    %vm611 = vcmp.gt.f32.partialorder %v592, 0.0
    %vm612 = vcmp.gt.f32.partialorder %v597, 0.0
    %vm613 = vcmp.gt.f32.partialorder %v602, 0.0
    %v614 = vstv %s605
    %v615 = vmul.f32 %v614, %v567
    %v616 = vmul.f32 %v614, %v572
    %v617 = vmul.f32 %v614, %v577
    %v618 = vmul.f32 %v614, %v582
    %v619 = vmul.f32 %v614, %v587
    %v620 = vmul.f32 %v614, %v592
    %v621 = vmul.f32 %v614, %v597
    %v622 = vmul.f32 %v614, %v602
    %v623 = vsel %vm606, %v567, %v615
    %v624 = vsel %vm607, %v572, %v616
    %v625 = vsel %vm608, %v577, %v617
    %v626 = vsel %vm609, %v582, %v618
    %v627 = vsel %vm610, %v587, %v619
    %v628 = vsel %vm611, %v592, %v620
    %v629 = vsel %vm612, %v597, %v621
    %v630 = vsel %vm613, %v602, %v622
    %633 = vrot.lane.b32.xlu0 %v625, 32
    %v634 = vpop.permute.xlu0 %633
    %635 = vrot.lane.b32.xlu0 %v626, 32
    %v636 = vpop.permute.xlu0 %635
    %641 = vrot.lane.b32.xlu0 %v627, 64
    %v642 = vpop.permute.xlu0 %641
    %643 = vrot.lane.b32.xlu0 %v628, 64
    %v644 = vpop.permute.xlu0 %643
    %649 = vrot.lane.b32.xlu0 %v629, 96
    %v650 = vpop.permute.xlu0 %649
    %651 = vrot.lane.b32.xlu0 %v630, 96
    %v652 = vpop.permute.xlu0 %651
    %v655 = vsel %vm73, %v623, %v634
    %v656 = vsel %vm73, %v624, %v636
    %v657 = vsel %vm331, %v655, %v642
    %v658 = vsel %vm331, %v656, %v644
    %vm659 = vcmask 785408
    %v660 = vsel %vm659, %v657, %v650
    %v661 = vsel %vm659, %v658, %v652
    %662 = vst [vmem:[%s15] sm:$0xff] %v660
    %663 = vst [vmem:[%s15 + $0x8] sm:$0xff] %v661
    %v664 = vld [vmem:[%s8] sm:$0xff]
    %v665 = vld [vmem:[%s8 + $0x8] sm:$0xff]
    %v666 = vld [vmem:[%s8 + $0x10] sm:$0xff]
    %v667 = vld [vmem:[%s8 + $0x18] sm:$0xff]
    %v668 = vld [vmem:[%s9] sm:$0x1]
    %v670 = vlaneseq
    %v671 = vshrl.u32 %v670, 7
    %v672 = vsub.s32 0, %v671
    %v673 = vrot.slane %v668, %v672
    %v676 = vsel %vm73, %v623, 0
    %v679 = vsel %vm73, %v624, 0
    %681 = vmatprep.subr.mxu0 0.0
    %682 = vmatpush1.msra.mxu0 %v664
    %683 = vmatprep.subr.mxu0 0.0
    %684 = vmatpush1.msra.mxu0 %v665
    %685 = vmatprep.subr.mxu0 0.0
    %686 = vmatpush1.msra.mxu0 %v666
    %687 = vmatprep.subr.mxu0 0.0
    %688 = vmatpush1.msra.mxu0 %v667
    %689 = vmatprep.subr.mxu0 0.0
    %690 = vmatpush1.msra.mxu0 0.0
    %691 = vmatprep.subr.mxu0 0.0
    %692 = vmatpush1.msra.mxu0 0.0
    %693 = vmatprep.subr.mxu0 0.0
    %694 = vmatpush1.msra.mxu0 0.0
    %695 = vmatprep.subr.mxu0 0.0
    %696 = vmatpush1.msra.mxu0 0.0
    %697 = vmatprep.subr.mxu0 0.0
    %698 = vmatpush1.msra.mxu0 0.0
    %699 = vmatprep.subr.mxu0 0.0
    %700 = vmatpush1.msra.mxu0 0.0
    %701 = vmatprep.subr.mxu0 0.0
    %702 = vmatpush1.msra.mxu0 0.0
    %703 = vmatprep.subr.mxu0 0.0
    %704 = vmatpush1.msra.mxu0 0.0
    %705 = vmatprep.subr.mxu0 0.0
    %706 = vmatpush1.msra.mxu0 0.0
    %707 = vmatprep.subr.mxu0 0.0
    %708 = vmatpush1.msra.mxu0 0.0
    %709 = vmatprep.subr.mxu0 0.0
    %710 = vmatpush1.msra.mxu0 0.0
    %711 = vmatprep.subr.mxu0 0.0
    %712 = vmatpush1.msra.mxu0 0.0
    %713 = vmatprep.subr.mxu0 0.0
    %714 = vmatpush1.msra.mxu0 0.0
    %715 = vmatprep.subr.mxu0 0.0
    %716 = vmatpush1.msra.mxu0 0.0
    %717 = vmatprep.subr.mxu0 0.0
    %718 = vmatpush1.msra.mxu0 0.0
    %719 = vmatprep.subr.mxu0 0.0
    %720 = vmatpush1.msra.mxu0 0.0
    %721 = vmatprep.subr.mxu0 0.0
    %722 = vmatpush1.msra.mxu0 0.0
    %723 = vmatprep.subr.mxu0 0.0
    %724 = vmatpush1.msra.mxu0 0.0
    %725 = vmatprep.subr.mxu0 0.0
    %726 = vmatpush1.msra.mxu0 0.0
    %727 = vmatprep.subr.mxu0 0.0
    %728 = vmatpush1.msra.mxu0 0.0
    %729 = vmatprep.subr.mxu0 0.0
    %730 = vmatpush1.msra.mxu0 0.0
    %731 = vmatprep.subr.mxu0 0.0
    %732 = vmatpush1.msra.mxu0 0.0
    %733 = vmatprep.subr.mxu0 0.0
    %734 = vmatpush1.msra.mxu0 0.0
    %735 = vmatprep.subr.mxu0 0.0
    %736 = vmatpush1.msra.mxu0 0.0
    %737 = vmatprep.subr.mxu0 0.0
    %738 = vmatpush1.msra.mxu0 0.0
    %739 = vmatprep.subr.mxu0 0.0
    %740 = vmatpush1.msra.mxu0 0.0
    %741 = vmatprep.subr.mxu0 0.0
    %742 = vmatpush1.msra.mxu0 0.0
    %743 = vmatprep.subr.mxu0 0.0
    %744 = vmatpush1.msra.mxu0 0.0
    %745 = vmatprep.mubr.f32.mxu0 0.0
    %746 = vmatmul.mubr.f32.gmra.mrb[0].mxu0 %v676
    %v747 = vpop.f32.mrb[0].mxu0
    %v748 = vadd.f32 %v673, %v747
    %v749 = vpop.f32.mrb[0].mxu0
    %750 = vmatprep.mubr.f32.mxu0 0.0
    %751 = vmatmul.mubr.f32.gmra.mrb[0].mxu0 %v679
    %v752 = vpop.f32.mrb[0].mxu0
    %v753 = vadd.f32 %v673, %v752
    %v754 = vpop.f32.mrb[0].mxu0
    %755 = vdwg.mxu0
    %v756 = vld [vmem:[%s10] sm:$0xff]
    %v757 = vld [vmem:[%s10 + $0x8] sm:$0xff]
    %v758 = vld [vmem:[%s10 + $0x10] sm:$0xff]
    %v759 = vld [vmem:[%s10 + $0x18] sm:$0xff]
    %v760 = vld [vmem:[%s11] sm:$0x1]
    %v762 = vlaneseq
    %v763 = vshrl.u32 %v762, 7
    %v764 = vsub.s32 0, %v763
    %v765 = vrot.slane %v760, %v764
    %v767 = vsel %vm73, %v627, 0
    %v769 = vsel %vm73, %v628, 0
    %771 = vmatprep.subr.mxu0 0.0
    %772 = vmatpush1.msra.mxu0 %v756
    %773 = vmatprep.subr.mxu0 0.0
    %774 = vmatpush1.msra.mxu0 %v757
    %775 = vmatprep.subr.mxu0 0.0
    %776 = vmatpush1.msra.mxu0 %v758
    %777 = vmatprep.subr.mxu0 0.0
    %778 = vmatpush1.msra.mxu0 %v759
    %779 = vmatprep.subr.mxu0 0.0
    %780 = vmatpush1.msra.mxu0 0.0
    %781 = vmatprep.subr.mxu0 0.0
    %782 = vmatpush1.msra.mxu0 0.0
    %783 = vmatprep.subr.mxu0 0.0
    %784 = vmatpush1.msra.mxu0 0.0
    %785 = vmatprep.subr.mxu0 0.0
    %786 = vmatpush1.msra.mxu0 0.0
    %787 = vmatprep.subr.mxu0 0.0
    %788 = vmatpush1.msra.mxu0 0.0
    %789 = vmatprep.subr.mxu0 0.0
    %790 = vmatpush1.msra.mxu0 0.0
    %791 = vmatprep.subr.mxu0 0.0
    %792 = vmatpush1.msra.mxu0 0.0
    %793 = vmatprep.subr.mxu0 0.0
    %794 = vmatpush1.msra.mxu0 0.0
    %795 = vmatprep.subr.mxu0 0.0
    %796 = vmatpush1.msra.mxu0 0.0
    %797 = vmatprep.subr.mxu0 0.0
    %798 = vmatpush1.msra.mxu0 0.0
    %799 = vmatprep.subr.mxu0 0.0
    %800 = vmatpush1.msra.mxu0 0.0
    %801 = vmatprep.subr.mxu0 0.0
    %802 = vmatpush1.msra.mxu0 0.0
    %803 = vmatprep.subr.mxu0 0.0
    %804 = vmatpush1.msra.mxu0 0.0
    %805 = vmatprep.subr.mxu0 0.0
    %806 = vmatpush1.msra.mxu0 0.0
    %807 = vmatprep.subr.mxu0 0.0
    %808 = vmatpush1.msra.mxu0 0.0
    %809 = vmatprep.subr.mxu0 0.0
    %810 = vmatpush1.msra.mxu0 0.0
    %811 = vmatprep.subr.mxu0 0.0
    %812 = vmatpush1.msra.mxu0 0.0
    %813 = vmatprep.subr.mxu0 0.0
    %814 = vmatpush1.msra.mxu0 0.0
    %815 = vmatprep.subr.mxu0 0.0
    %816 = vmatpush1.msra.mxu0 0.0
    %817 = vmatprep.subr.mxu0 0.0
    %818 = vmatpush1.msra.mxu0 0.0
    %819 = vmatprep.subr.mxu0 0.0
    %820 = vmatpush1.msra.mxu0 0.0
    %821 = vmatprep.subr.mxu0 0.0
    %822 = vmatpush1.msra.mxu0 0.0
    %823 = vmatprep.subr.mxu0 0.0
    %824 = vmatpush1.msra.mxu0 0.0
    %825 = vmatprep.subr.mxu0 0.0
    %826 = vmatpush1.msra.mxu0 0.0
    %827 = vmatprep.subr.mxu0 0.0
    %828 = vmatpush1.msra.mxu0 0.0
    %829 = vmatprep.subr.mxu0 0.0
    %830 = vmatpush1.msra.mxu0 0.0
    %831 = vmatprep.subr.mxu0 0.0
    %832 = vmatpush1.msra.mxu0 0.0
    %833 = vmatprep.subr.mxu0 0.0
    %834 = vmatpush1.msra.mxu0 0.0
    %835 = vmatprep.mubr.f32.mxu0 0.0
    %836 = vmatmul.mubr.f32.gmra.mrb[0].mxu0 %v767
    %v837 = vpop.f32.mrb[0].mxu0
    %v838 = vadd.f32 %v765, %v837
    %v839 = vpop.f32.mrb[0].mxu0
    %840 = vmatprep.mubr.f32.mxu0 0.0
    %841 = vmatmul.mubr.f32.gmra.mrb[0].mxu0 %v769
    %v842 = vpop.f32.mrb[0].mxu0
    %v843 = vadd.f32 %v765, %v842
    %v844 = vpop.f32.mrb[0].mxu0
    %845 = vdwg.mxu0
    %v846 = vld [vmem:[%s12] sm:$0xff]
    %v847 = vld [vmem:[%s12 + $0x8] sm:$0xff]
    %v848 = vld [vmem:[%s13] sm:$0xff]
    %v849 = vld [vmem:[%s13 + $0x8] sm:$0xff]
    %vm850 = vcmask 130048
    %v852 = vsel %vm850, %v838, 0
    %v855 = vsel %vm850, %v843, 0
    %857 = vmatprep.subr.mxu0 0.0
    %858 = vmatpush1.msra.mxu0 %v848
    %859 = vmatprep.subr.mxu0 0.0
    %860 = vmatpush1.msra.mxu0 %v849
    %861 = vmatprep.subr.mxu0 0.0
    %862 = vmatpush1.msra.mxu0 0.0
    %863 = vmatprep.subr.mxu0 0.0
    %864 = vmatpush1.msra.mxu0 0.0
    %865 = vmatprep.subr.mxu0 0.0
    %866 = vmatpush1.msra.mxu0 0.0
    %867 = vmatprep.subr.mxu0 0.0
    %868 = vmatpush1.msra.mxu0 0.0
    %869 = vmatprep.subr.mxu0 0.0
    %870 = vmatpush1.msra.mxu0 0.0
    %871 = vmatprep.subr.mxu0 0.0
    %872 = vmatpush1.msra.mxu0 0.0
    %873 = vmatprep.subr.mxu0 0.0
    %874 = vmatpush1.msra.mxu0 0.0
    %875 = vmatprep.subr.mxu0 0.0
    %876 = vmatpush1.msra.mxu0 0.0
    %877 = vmatprep.subr.mxu0 0.0
    %878 = vmatpush1.msra.mxu0 0.0
    %879 = vmatprep.subr.mxu0 0.0
    %880 = vmatpush1.msra.mxu0 0.0
    %881 = vmatprep.subr.mxu0 0.0
    %882 = vmatpush1.msra.mxu0 0.0
    %883 = vmatprep.subr.mxu0 0.0
    %884 = vmatpush1.msra.mxu0 0.0
    %885 = vmatprep.subr.mxu0 0.0
    %886 = vmatpush1.msra.mxu0 0.0
    %887 = vmatprep.subr.mxu0 0.0
    %888 = vmatpush1.msra.mxu0 0.0
    %889 = vmatprep.subr.mxu0 0.0
    %890 = vmatpush1.msra.mxu0 0.0
    %891 = vmatprep.subr.mxu0 0.0
    %892 = vmatpush1.msra.mxu0 0.0
    %893 = vmatprep.subr.mxu0 0.0
    %894 = vmatpush1.msra.mxu0 0.0
    %895 = vmatprep.subr.mxu0 0.0
    %896 = vmatpush1.msra.mxu0 0.0
    %897 = vmatprep.subr.mxu0 0.0
    %898 = vmatpush1.msra.mxu0 0.0
    %899 = vmatprep.subr.mxu0 0.0
    %900 = vmatpush1.msra.mxu0 0.0
    %901 = vmatprep.subr.mxu0 0.0
    %902 = vmatpush1.msra.mxu0 0.0
    %903 = vmatprep.subr.mxu0 0.0
    %904 = vmatpush1.msra.mxu0 0.0
    %905 = vmatprep.subr.mxu0 0.0
    %906 = vmatpush1.msra.mxu0 0.0
    %907 = vmatprep.subr.mxu0 0.0
    %908 = vmatpush1.msra.mxu0 0.0
    %909 = vmatprep.subr.mxu0 0.0
    %910 = vmatpush1.msra.mxu0 0.0
    %911 = vmatprep.subr.mxu0 0.0
    %912 = vmatpush1.msra.mxu0 0.0
    %913 = vmatprep.subr.mxu0 0.0
    %914 = vmatpush1.msra.mxu0 0.0
    %915 = vmatprep.subr.mxu0 0.0
    %916 = vmatpush1.msra.mxu0 0.0
    %917 = vmatprep.subr.mxu0 0.0
    %918 = vmatpush1.msra.mxu0 0.0
    %919 = vmatprep.subr.mxu0 0.0
    %920 = vmatpush1.msra.mxu0 0.0
    %921 = vmatprep.mubr.f32.mxu0 0.0
    %922 = vmatmul.mubr.f32.gmra.mrb[0].mxu0 %v852
    %v923 = vpop.f32.mrb[0].mxu0
    %v924 = vadd.f32 0.0, %v923
    %v925 = vpop.f32.mrb[0].mxu0
    %926 = vmatprep.mubr.f32.mxu0 0.0
    %927 = vmatmul.mubr.f32.gmra.mrb[0].mxu0 %v855
    %v928 = vpop.f32.mrb[0].mxu0
    %v929 = vadd.f32 0.0, %v928
    %v930 = vpop.f32.mrb[0].mxu0
    %931 = vdwg.mxu0
    %v933 = vsel %vm850, %v748, 0
    %v936 = vsel %vm850, %v753, 0
    %938 = vmatprep.subr.mxu0 0.0
    %939 = vmatpush1.msra.mxu0 %v846
    %940 = vmatprep.subr.mxu0 0.0
    %941 = vmatpush1.msra.mxu0 %v847
    %942 = vmatprep.subr.mxu0 0.0
    %943 = vmatpush1.msra.mxu0 0.0
    %944 = vmatprep.subr.mxu0 0.0
    %945 = vmatpush1.msra.mxu0 0.0
    %946 = vmatprep.subr.mxu0 0.0
    %947 = vmatpush1.msra.mxu0 0.0
    %948 = vmatprep.subr.mxu0 0.0
    %949 = vmatpush1.msra.mxu0 0.0
    %950 = vmatprep.subr.mxu0 0.0
    %951 = vmatpush1.msra.mxu0 0.0
    %952 = vmatprep.subr.mxu0 0.0
    %953 = vmatpush1.msra.mxu0 0.0
    %954 = vmatprep.subr.mxu0 0.0
    %955 = vmatpush1.msra.mxu0 0.0
    %956 = vmatprep.subr.mxu0 0.0
    %957 = vmatpush1.msra.mxu0 0.0
    %958 = vmatprep.subr.mxu0 0.0
    %959 = vmatpush1.msra.mxu0 0.0
    %960 = vmatprep.subr.mxu0 0.0
    %961 = vmatpush1.msra.mxu0 0.0
    %962 = vmatprep.subr.mxu0 0.0
    %963 = vmatpush1.msra.mxu0 0.0
    %964 = vmatprep.subr.mxu0 0.0
    %965 = vmatpush1.msra.mxu0 0.0
    %966 = vmatprep.subr.mxu0 0.0
    %967 = vmatpush1.msra.mxu0 0.0
    %968 = vmatprep.subr.mxu0 0.0
    %969 = vmatpush1.msra.mxu0 0.0
    %970 = vmatprep.subr.mxu0 0.0
    %971 = vmatpush1.msra.mxu0 0.0
    %972 = vmatprep.subr.mxu0 0.0
    %973 = vmatpush1.msra.mxu0 0.0
    %974 = vmatprep.subr.mxu0 0.0
    %975 = vmatpush1.msra.mxu0 0.0
    %976 = vmatprep.subr.mxu0 0.0
    %977 = vmatpush1.msra.mxu0 0.0
    %978 = vmatprep.subr.mxu0 0.0
    %979 = vmatpush1.msra.mxu0 0.0
    %980 = vmatprep.subr.mxu0 0.0
    %981 = vmatpush1.msra.mxu0 0.0
    %982 = vmatprep.subr.mxu0 0.0
    %983 = vmatpush1.msra.mxu0 0.0
    %984 = vmatprep.subr.mxu0 0.0
    %985 = vmatpush1.msra.mxu0 0.0
    %986 = vmatprep.subr.mxu0 0.0
    %987 = vmatpush1.msra.mxu0 0.0
    %988 = vmatprep.subr.mxu0 0.0
    %989 = vmatpush1.msra.mxu0 0.0
    %990 = vmatprep.subr.mxu0 0.0
    %991 = vmatpush1.msra.mxu0 0.0
    %992 = vmatprep.subr.mxu0 0.0
    %993 = vmatpush1.msra.mxu0 0.0
    %994 = vmatprep.subr.mxu0 0.0
    %995 = vmatpush1.msra.mxu0 0.0
    %996 = vmatprep.subr.mxu0 0.0
    %997 = vmatpush1.msra.mxu0 0.0
    %998 = vmatprep.subr.mxu0 0.0
    %999 = vmatpush1.msra.mxu0 0.0
    %1000 = vmatprep.subr.mxu0 0.0
    %1001 = vmatpush1.msra.mxu0 0.0
    %1002 = vmatprep.mubr.f32.mxu0 0.0
    %1003 = vmatmul.mubr.f32.gmra.mrb[0].mxu0 %v933
    %v1004 = vpop.f32.mrb[0].mxu0
    %v1005 = vadd.f32 %v924, %v1004
    %v1006 = vpop.f32.mrb[0].mxu0
    %1007 = vmatprep.mubr.f32.mxu0 0.0
    %1008 = vmatmul.mubr.f32.gmra.mrb[0].mxu0 %v936
    %v1009 = vpop.f32.mrb[0].mxu0
    %v1010 = vadd.f32 %v929, %v1009
    %v1011 = vpop.f32.mrb[0].mxu0
    %1012 = vdwg.mxu0
    %v1013 = vld [vmem:[%s3] sm:$0xff]
    %v1014 = vld [vmem:[%s3 + $0x8] sm:$0xff]
    %s1015 = sld [smem:[#allocation2 + $0x1]]
    %v1016 = vstv %s1015
    %v1017 = vmul.f32 %v1013, %v1016
    %v1018 = vmul.f32 %v1014, %v1016
    %v1019 = vadd.f32 %v1005, %v1017
    %v1020 = vadd.f32 %v1010, %v1018
    %s1021 = sld [smem:[#allocation2 + $0x2]]
    %v1022 = vstv %s1021
    %v1023 = vadd.f32 %v1019, %v1022
    %v1024 = vadd.f32 %v1020, %v1022
    %v1025 = vxor.u32 %v1023, 2147483648
    %v1026 = vxor.u32 %v1024, 2147483648
    %v1027 = vmul.f32 %v1025, 1.442695
    %v1028 = vpow.pop %v1027
    %v1029 = vmul.f32 %v1026, 1.442695
    %v1030 = vpow.pop %v1029
    %v1031 = vadd.f32 %v1028, 1.0
    %v1032 = vadd.f32 %v1030, 1.0
    %v1033 = vrcp.pop %v1031
    %v1034 = vmul.f32 1.0, %v1033
    %v1035 = vrcp.pop %v1032
    %v1036 = vmul.f32 1.0, %v1035
    %vm1037 = vcmask 7168
    %1038 = vst.msk [vmem:[%s16] sm:$0xff] %vm1037, %v1034
    %1039 = vst.msk [vmem:[%s16 + $0x8] sm:$0xff] %vm1037, %v1036
    // Predicated region
    $region66: #{model_forward.1} parent=1 // pred_check
      _
    $region67: #{model_forward.1} parent=1 // pred_check_branch
      %1041 = sbr.rel (0) target = $region69
    $region68: #{model_forward.1} parent=1 // pred_region
      _
    $region69: #{model_forward.1} parent=1 // pred_fallthru
      _
    // Predicated region
    $region70: #{model_forward.1} parent=1 // pred_check
      _
    $region71: #{model_forward.1} parent=1 // pred_check_branch
      %1043 = sbr.rel (0) target = $region73
    $region72: #{model_forward.1} parent=1 // pred_region
      _
    $region73: #{model_forward.1} parent=1 // pred_fallthru
      _
    // Predicated region
    $region74: #{model_forward.1} parent=1 // pred_check
      _
    $region75: #{model_forward.1} parent=1 // pred_check_branch
      %1045 = sbr.rel (0) target = $region77
    $region76: #{model_forward.1} parent=1 // pred_region
      _
    $region77: #{model_forward.1} parent=1 // pred_fallthru
      _
    // Predicated region
    $region78: #{model_forward.1} parent=1 // pred_check
      _
    $region79: #{model_forward.1} parent=1 // pred_check_branch
      %1047 = sbr.rel (0) target = $region81
    $region80: #{model_forward.1} parent=1 // pred_region
      _
    $region81: #{model_forward.1} parent=1 // pred_fallthru
      _
    %1048 = vsyncpa [#allocation3], 1

</llo_original>
